<compile_context>
chip_gen: v7x
topology: tpu7x:2x2x1
jax: 0.10.0
libtpu: 0.0.40
codegen_flags: <defaults>
</compile_context>

<pallas_src>
import functools

import jax
import jax.numpy as jnp
from jax.experimental import pallas as pl
from jax.experimental.pallas import tpu as pltpu


def _sum_all(x):
    """Full reduction to a (1, 1) tile, staying 2-D (lane reduce, then sublane)."""
    return jnp.sum(jnp.sum(x, axis=1, keepdims=True), axis=0, keepdims=True)


def _max_all(x):
    return jnp.max(jnp.max(x, axis=1, keepdims=True), axis=0, keepdims=True)


def _clip_loss_kernel(scale_ref,      # SMEM (1,) f32         (scalar prefetch)
                      img_ref,        # VMEM (T, D)           image row tile i (input dtype)
                      txt_ref,        # VMEM (T, D) streamed  or (N, D) resident text
                      loss_ref,       # VMEM (1, 1) f32       output
                      *scratch,
                      n_rows, block_n, split, txt_resident):
    if split:
        img_hi_ref, img_lo_ref = scratch[:2]
        row_m_ref, row_l_ref, col_m_ref, col_l_ref, acc_ref = scratch[2:]
    else:
        img_hi_ref = scratch[0]
        img_lo_ref = None
        row_m_ref, row_l_ref, col_m_ref, col_l_ref, acc_ref = scratch[1:]

    i = pl.program_id(0)
    j = pl.program_id(1)
    n_i = pl.num_programs(0)
    n_j = pl.num_programs(1)

    scale = scale_ref[0]

    # ---- global init on the very first grid step ----------------------------
    @pl.when(jnp.logical_and(i == 0, j == 0))
    def _():
        acc_ref[...] = jnp.zeros(acc_ref.shape, jnp.float32)
        col_m_ref[...] = jnp.full(col_m_ref.shape, -jnp.inf, jnp.float32)
        col_l_ref[...] = jnp.zeros(col_l_ref.shape, jnp.float32)

    # ---- per-row-band init (a new row band starts at j == 0) -----------------
    @pl.when(j == 0)
    def _():
        # Fold the logit scale into the image tile once per row band (O(T*D)).
        img_f32 = img_ref[...].astype(jnp.float32) * scale
        hi = img_f32.astype(img_hi_ref.dtype)
        img_hi_ref[...] = hi
        if split:
            # bf16x3: keep the low bf16 residual so hi + lo ~ f32(scale*img).
            img_lo_ref[...] = (img_f32 - hi.astype(jnp.float32)).astype(img_lo_ref.dtype)
        row_m_ref[...] = jnp.full(row_m_ref.shape, -jnp.inf, jnp.float32)
        row_l_ref[...] = jnp.zeros(row_l_ref.shape, jnp.float32)

    # ---- current text tile ----------------------------------------------------
    if txt_resident:
        c0 = pl.multiple_of(j * block_n, block_n)
        txt_blk = txt_ref[pl.ds(c0, block_n), :]           # slice of the resident matrix
    else:
        txt_blk = txt_ref[...]                             # streamed (T, D) tile

    # ---- scaled logits tile: (T, T) = (scale*img_i) @ txt_j^T ("NT" matmul) ----
    dims = (((1,), (1,)), ((), ()))
    if split:
        # bf16x3: drop only the lo*lo term -> ~f32 accuracy at bf16 MXU rate.
        txt_f32 = txt_blk.astype(jnp.float32)
        t_hi = txt_f32.astype(jnp.bfloat16)
        t_lo = (txt_f32 - t_hi.astype(jnp.float32)).astype(jnp.bfloat16)
        a_hi = img_hi_ref[...]
        a_lo = img_lo_ref[...]
        s = jax.lax.dot_general(a_hi, t_hi, dims, preferred_element_type=jnp.float32)
        s = s + jax.lax.dot_general(a_hi, t_lo, dims, preferred_element_type=jnp.float32)
        s = s + jax.lax.dot_general(a_lo, t_hi, dims, preferred_element_type=jnp.float32)
    else:
        s = jax.lax.dot_general(
            img_hi_ref[...], txt_blk.astype(img_hi_ref.dtype), dims,
            preferred_element_type=jnp.float32)            # (T, T) f32

    # ---- ONE full-tile exp, referenced to the tile max (exponents <= 0) --------
    m_tile = _max_all(s)                                   # (1, 1)
    p = jnp.exp(s - m_tile)                                # (T, T): the only O(T^2) exp
    row_part = jnp.sum(p, axis=1, keepdims=True)           # (T, 1)
    col_part = jnp.sum(p, axis=0, keepdims=True)           # (1, T)

    # ---- online row-LSE update (image -> text CE) ------------------------------
    row_m_old = row_m_ref[...]                             # (1, 1) band-level reference
    row_m_new = jnp.maximum(row_m_old, m_tile)
    row_l_ref[...] = (row_l_ref[...] * jnp.exp(row_m_old - row_m_new)
                      + row_part * jnp.exp(m_tile - row_m_new))
    row_m_ref[...] = row_m_new

    # ---- online column-LSE update (text -> image CE; logits_per_text = s^T) ----
    cm_old = col_m_ref[pl.ds(j, 1), :]                     # (1, T)
    cm_new = jnp.maximum(cm_old, m_tile)
    cl_new = (col_l_ref[pl.ds(j, 1), :] * jnp.exp(cm_old - cm_new)
              + col_part * jnp.exp(m_tile - cm_new))
    col_m_ref[pl.ds(j, 1), :] = cm_new
    col_l_ref[pl.ds(j, 1), :] = cl_new

    # ---- diagonal ("correct" logits, labels == arange(N)) -----------------------
    # Computed from the raw f32 features (not the bf16 folded copy) -> exact diag.
    @pl.when(i == j)
    def _():
        d = _sum_all(img_ref[...].astype(jnp.float32) * txt_blk.astype(jnp.float32))
        acc_ref[...] -= (2.0 * scale) * d                  # appears in both CE terms

    # ---- finalize this row band's LSEs on its last column tile ------------------
    @pl.when(j == n_j - 1)
    def _():
        acc_ref[...] += _sum_all(jnp.log(row_l_ref[...]) + row_m_ref[...])

    # ---- finalize this column band's LSEs on the last row tile ------------------
    @pl.when(i == n_i - 1)
    def _():
        acc_ref[...] += _sum_all(jnp.log(cl_new) + cm_new)

    # ---- write the scalar loss on the very last grid step -----------------------
    @pl.when(jnp.logical_and(i == n_i - 1, j == n_j - 1))
    def _():
        loss_ref[...] = acc_ref[...] * jnp.float32(0.5 / n_rows)


def _pick_config(n, d, in_isz, mm_isz, split, *, block_n=None,
                 txt_resident=None, vmem_budget_bytes=None):
    """Pick (block_n, txt_resident, vmem_limit) from a VMEM budget."""
    if vmem_budget_bytes is None:
        try:
            cap = int(pltpu.get_tpu_info().vmem_capacity_bytes)
        except Exception:
            cap = 64 * 1024 * 1024          # conservative: v7x has 64 MiB / TensorCore
        vmem_budget_bytes = min(cap * 3 // 4, 96 * 1024 * 1024)

    def vmem_bytes(t, resident):
        b = 2 * t * d * in_isz                              # image tile (double-buffered)
        b += (2 * n if resident else 2 * t) * d * in_isz    # text: resident / streamed tiles
        b += (2 if split else 1) * t * d * mm_isz           # scale*img scratch (hi [+ lo])
        b += 3 * t * t * 4                                  # (T,T) f32 logits/exp temporaries
        b += (3 if split else 2) * t * d * 4                # per-step f32 tile temporaries
        b += 2 * n * 4 + t * 4 + (256 << 10)                # col/row LSE state + slack
        return b

    if block_n is not None:
        candidates = [block_n]
    else:
        sizes = ([2048] if d <= 256 else []) + [1024, 512, 256, 128]
        candidates = [t for t in sizes if n % t == 0] or [n]

    prefs = (True, False) if txt_resident is None else (bool(txt_resident),)
    for resident in prefs:
        for t in candidates:
            if vmem_bytes(t, resident) <= vmem_budget_bytes:
                return t, resident, vmem_budget_bytes
    return candidates[-1], False, vmem_budget_bytes


def clip_loss(image_features, text_features, logit_scale, *, block_n=None,
              mxu_precision="auto", txt_resident=None, vmem_budget_bytes=None,
              output_dict=False):
    """Pallas equivalent of ClipLoss.forward (world_size == 1)."""
    n, d = image_features.shape
    assert text_features.shape == (n, d), "paired image/text batches required"
    in_dtype = image_features.dtype

    if mxu_precision == "auto":
        # bf16 inputs: native bf16 MXU.  f32 inputs: bf16x3 (3 bf16 matmuls with
        # f32 accumulation, ~f32-accurate) instead of the 4-8x slower f32 MXU path.
        mxu_precision = "bf16" if in_dtype == jnp.bfloat16 else "bf16x3"
    if mxu_precision == "bf16x3" and in_dtype == jnp.bfloat16:
        mxu_precision = "bf16"              # nothing to split
    split = (mxu_precision == "bf16x3")
    mm_dtype = jnp.bfloat16 if mxu_precision in ("bf16", "bf16x3") else in_dtype

    in_isz = jnp.dtype(in_dtype).itemsize
    mm_isz = jnp.dtype(mm_dtype).itemsize

    block_n, txt_resident, vmem_limit = _pick_config(
        n, d, in_isz, mm_isz, split, block_n=block_n,
        txt_resident=txt_resident, vmem_budget_bytes=vmem_budget_bytes)
    assert n % block_n == 0, (n, block_n)
    n_rt = n // block_n                     # row tiles (image)
    n_ct = n // block_n                     # column tiles (text)

    scale = jnp.asarray(logit_scale, jnp.float32).reshape((1,))

    kernel = functools.partial(
        _clip_loss_kernel, n_rows=n, block_n=block_n, split=split,
        txt_resident=txt_resident)

    if txt_resident:
        # Whole text matrix as one block with a constant index -> fetched once,
        # stays VMEM-resident, sliced with pl.ds inside the kernel.
        txt_spec = pl.BlockSpec((n, d), lambda i, j, s: (0, 0))
    else:
        # Streamed text tiles (default double-buffered pipeline).
        txt_spec = pl.BlockSpec((block_n, d), lambda i, j, s: (j, 0))

    scratch_shapes = [pltpu.VMEM((block_n, d), mm_dtype)]            # scale*img (hi)
    if split:
        scratch_shapes.append(pltpu.VMEM((block_n, d), mm_dtype))    # scale*img (lo)
    scratch_shapes += [
        pltpu.VMEM((1, 1), jnp.float32),            # row band running max (tile-max ref)
        pltpu.VMEM((block_n, 1), jnp.float32),      # row running exp-sums
        pltpu.VMEM((n_ct, block_n), jnp.float32),   # column running max
        pltpu.VMEM((n_ct, block_n), jnp.float32),   # column running exp-sums
        pltpu.VMEM((1, 1), jnp.float32),            # scalar loss accumulator
    ]

    grid_spec = pltpu.PrefetchScalarGridSpec(
        num_scalar_prefetch=1,
        grid=(n_rt, n_ct),                          # j (columns) is the fast axis
        in_specs=[
            # image row tile: constant across j -> resident, no per-step re-DMA
            pl.BlockSpec((block_n, d), lambda i, j, s: (i, 0)),
            txt_spec,
        ],
        out_specs=pl.BlockSpec((1, 1), lambda i, j, s: (0, 0)),
        scratch_shapes=scratch_shapes,
    )

    cost = pl.CostEstimate(
        flops=2 * n * n * d * (3 if split else 1),
        transcendentals=n * n + 4 * n,
        bytes_accessed=(1 + (1 if txt_resident else n_rt)) * n * d * in_isz + 8,
    )

    out = pl.pallas_call(
        kernel,
        out_shape=jax.ShapeDtypeStruct((1, 1), jnp.float32),
        grid_spec=grid_spec,
        compiler_params=pltpu.CompilerParams(
            # Column LSE state is carried across row tiles and row LSE state
            # across column tiles, so neither axis may be sharded across cores.
            dimension_semantics=("arbitrary", "arbitrary"),
            vmem_limit_bytes=int(vmem_limit),
        ),
        cost_estimate=cost,
    )(scale, image_features, text_features)

    loss = out[0, 0]
    return {"contrastive_loss": loss} if output_dict else loss


def clip_loss_ref(image_features, text_features, logit_scale):
    """Pure-JAX reference (mirrors the PyTorch module) for sanity checking."""
    imgf = image_features.astype(jnp.float32)
    txtf = text_features.astype(jnp.float32)
    logits_i = logit_scale * imgf @ txtf.T
    logits_t = logits_i.T
    labels = jnp.arange(logits_i.shape[0])

    def ce(logits):
        lse = jax.nn.logsumexp(logits, axis=1)
        correct = jnp.take_along_axis(logits, labels[:, None], axis=1)[:, 0]
        return jnp.mean(lse - correct)

    return (ce(logits_i) + ce(logits_t)) / 2.0


if __name__ == "__main__":
    key = jax.random.PRNGKey(0)
    k_img, k_txt = jax.random.split(key)
    logit_scale = jnp.float32(10.0)

    def make(n, d, dtype):
        img = jax.random.normal(k_img, (n, d), jnp.float32)
        txt = jax.random.normal(k_txt, (n, d), jnp.float32)
        # CLIP-style: L2-normalized features, exp(learned temperature) logit scale.
        img = img / jnp.linalg.norm(img, axis=-1, keepdims=True)
        txt = txt / jnp.linalg.norm(txt, axis=-1, keepdims=True)
        return img.astype(dtype), txt.astype(dtype)

    # (name, N, D, dtype, kwargs, tol) -- covers: single tile, tiled + resident
    # text, tiled + streamed text (all bf16x3 from f32 inputs), and bf16 inputs.
    cases = [
        ("tiny_single_tile", 8, 32, jnp.float32, {}, 1e-4),
        ("tiled_resident", 256, 128, jnp.float32, dict(block_n=128), 1e-4),
        ("tiled_streaming", 256, 128, jnp.float32,
         dict(block_n=128, txt_resident=False), 1e-4),
        ("tiled_bf16", 256, 128, jnp.bfloat16, dict(block_n=128), 2e-2),
    ]
    for name, n, d, dtype, kwargs, tol in cases:
        img, txt = make(n, d, dtype)
        loss = clip_loss(img, txt, logit_scale, **kwargs)
        jax.block_until_ready(loss)
        ref = clip_loss_ref(img, txt, logit_scale)
        assert jnp.allclose(loss, ref, rtol=tol, atol=tol), (name, loss, ref)

    print("KERNEL_OK")
</pallas_src>

<mosaic_0001>
module attributes {stable_mosaic.version = 11 : i64} {
  func.func @_clip_loss_kernel(%arg0: i32, %arg1: i32, %arg2: memref<1xf32, #tpu.memory_space<smem>>, %arg3: memref<8x32xf32, #tpu.memory_space<vmem>>, %arg4: memref<8x32xf32, #tpu.memory_space<vmem>>, %arg5: memref<1x1xf32, #tpu.memory_space<vmem>>, %arg6: memref<8x32xbf16, #tpu.memory_space<vmem>>, %arg7: memref<8x32xbf16, #tpu.memory_space<vmem>>, %arg8: memref<1x1xf32, #tpu.memory_space<vmem>>, %arg9: memref<8x1xf32, #tpu.memory_space<vmem>>, %arg10: memref<1x8xf32, #tpu.memory_space<vmem>>, %arg11: memref<1x8xf32, #tpu.memory_space<vmem>>, %arg12: memref<1x1xf32, #tpu.memory_space<vmem>>) attributes {dimension_semantics = [#tpu.dimension_semantics<arbitrary>, #tpu.dimension_semantics<arbitrary>], iteration_bounds = array<i64: 1, 1>, scalar_prefetch = 1 : i64, scratch_operands = 7 : i64, tpu.core_type = #tpu.core_type<tc>, window_params = [{transform_indices = @transform_0, window_bounds = array<i64: 8, 32>}, {pipeline_mode = #tpu.pipeline_mode<synchronous>, transform_indices = @transform_1, window_bounds = array<i64: 8, 32>}, {pipeline_mode = #tpu.pipeline_mode<synchronous>, transform_indices = @transform_2, window_bounds = array<i64: 1, 1>}]} {
    %c0 = arith.constant 0 : index
    %0 = memref.load %arg2[%c0] : memref<1xf32, #tpu.memory_space<smem>>
    %c0_i32 = arith.constant 0 : i32
    %1 = arith.cmpi eq, %arg0, %c0_i32 : i32
    %c0_i32_0 = arith.constant 0 : i32
    %2 = arith.cmpi eq, %arg1, %c0_i32_0 : i32
    %3 = arith.andi %1, %2 : i1
    %4 = arith.extui %3 : i1 to i32
    %c0_i32_1 = arith.constant 0 : i32
    %5 = arith.cmpi ne, %4, %c0_i32_1 : i32
    scf.if %5 {
      %cst_35 = arith.constant 0.000000e+00 : f32
      %81 = vector.broadcast %cst_35 : f32 to vector<1x1xf32>
      %c0_36 = arith.constant 0 : index
      %c0_37 = arith.constant 0 : index
      %82 = vector.load %arg12[%c0_36, %c0_37] : memref<1x1xf32, #tpu.memory_space<vmem>>, vector<1x1xf32>
      tpu.vector_store %arg12[%c0_36, %c0_37], %81 {strides = array<i32>} : memref<1x1xf32, #tpu.memory_space<vmem>>, vector<1x1xf32>,
      %cst_38 = arith.constant 0xFF800000 : f32
      %83 = vector.broadcast %cst_38 : f32 to vector<1x8xf32>
      %c0_39 = arith.constant 0 : index
      %c0_40 = arith.constant 0 : index
      %84 = vector.load %arg10[%c0_39, %c0_40] : memref<1x8xf32, #tpu.memory_space<vmem>>, vector<1x8xf32>
      tpu.vector_store %arg10[%c0_39, %c0_40], %83 {strides = array<i32>} : memref<1x8xf32, #tpu.memory_space<vmem>>, vector<1x8xf32>,
      %cst_41 = arith.constant 0.000000e+00 : f32
      %85 = vector.broadcast %cst_41 : f32 to vector<1x8xf32>
      %c0_42 = arith.constant 0 : index
      %c0_43 = arith.constant 0 : index
      %86 = vector.load %arg11[%c0_42, %c0_43] : memref<1x8xf32, #tpu.memory_space<vmem>>, vector<1x8xf32>
      tpu.vector_store %arg11[%c0_42, %c0_43], %85 {strides = array<i32>} : memref<1x8xf32, #tpu.memory_space<vmem>>, vector<1x8xf32>,
    } else {
    }
    %c0_i32_2 = arith.constant 0 : i32
    %6 = arith.cmpi eq, %arg1, %c0_i32_2 : i32
    %7 = arith.extui %6 : i1 to i32
    %c0_i32_3 = arith.constant 0 : i32
    %8 = arith.cmpi ne, %7, %c0_i32_3 : i32
    scf.if %8 {
      %c0_35 = arith.constant 0 : index
      %c0_36 = arith.constant 0 : index
      %81 = vector.load %arg3[%c0_35, %c0_36] : memref<8x32xf32, #tpu.memory_space<vmem>>, vector<8x32xf32>
      %82 = vector.broadcast %0 : f32 to vector<8x32xf32>
      %83 = arith.mulf %81, %82 : vector<8x32xf32>
      %84 = arith.truncf %83 : vector<8x32xf32> to vector<8x32xbf16>
      %c0_37 = arith.constant 0 : index
      %c0_38 = arith.constant 0 : index
      %85 = vector.load %arg6[%c0_37, %c0_38] : memref<8x32xbf16, #tpu.memory_space<vmem>>, vector<8x32xbf16>
      tpu.vector_store %arg6[%c0_37, %c0_38], %84 {strides = array<i32>} : memref<8x32xbf16, #tpu.memory_space<vmem>>, vector<8x32xbf16>,
      %86 = arith.extf %84 : vector<8x32xbf16> to vector<8x32xf32>
      %87 = arith.subf %83, %86 : vector<8x32xf32>
      %88 = arith.truncf %87 : vector<8x32xf32> to vector<8x32xbf16>
      %c0_39 = arith.constant 0 : index
      %c0_40 = arith.constant 0 : index
      %89 = vector.load %arg7[%c0_39, %c0_40] : memref<8x32xbf16, #tpu.memory_space<vmem>>, vector<8x32xbf16>
      tpu.vector_store %arg7[%c0_39, %c0_40], %88 {strides = array<i32>} : memref<8x32xbf16, #tpu.memory_space<vmem>>, vector<8x32xbf16>,
      %cst_41 = arith.constant 0xFF800000 : f32
      %90 = vector.broadcast %cst_41 : f32 to vector<1x1xf32>
      %c0_42 = arith.constant 0 : index
      %c0_43 = arith.constant 0 : index
      %91 = vector.load %arg8[%c0_42, %c0_43] : memref<1x1xf32, #tpu.memory_space<vmem>>, vector<1x1xf32>
      tpu.vector_store %arg8[%c0_42, %c0_43], %90 {strides = array<i32>} : memref<1x1xf32, #tpu.memory_space<vmem>>, vector<1x1xf32>,
      %cst_44 = arith.constant 0.000000e+00 : f32
      %92 = vector.broadcast %cst_44 : f32 to vector<8x1xf32>
      %c0_45 = arith.constant 0 : index
      %c0_46 = arith.constant 0 : index
      %93 = vector.load %arg9[%c0_45, %c0_46] : memref<8x1xf32, #tpu.memory_space<vmem>>, vector<8x1xf32>
      tpu.vector_store %arg9[%c0_45, %c0_46], %92 {strides = array<i32>} : memref<8x1xf32, #tpu.memory_space<vmem>>, vector<8x1xf32>,
    } else {
    }
    %c8_i32 = arith.constant 8 : i32
    %9 = arith.muli %arg1, %c8_i32 : i32
    %10 = tpu.assume_multiple %9, 8 : i32
    %11 = arith.index_cast %10 : i32 to index
    %c0_4 = arith.constant 0 : index
    %12 = vector.load %arg4[%11, %c0_4] : memref<8x32xf32, #tpu.memory_space<vmem>>, vector<8x32xf32>
    %13 = arith.truncf %12 : vector<8x32xf32> to vector<8x32xbf16>
    %14 = arith.extf %13 : vector<8x32xbf16> to vector<8x32xf32>
    %15 = arith.subf %12, %14 : vector<8x32xf32>
    %16 = arith.truncf %15 : vector<8x32xf32> to vector<8x32xbf16>
    %c0_5 = arith.constant 0 : index
    %c0_6 = arith.constant 0 : index
    %17 = vector.load %arg6[%c0_5, %c0_6] : memref<8x32xbf16, #tpu.memory_space<vmem>>, vector<8x32xbf16>
    %c0_7 = arith.constant 0 : index
    %c0_8 = arith.constant 0 : index
    %18 = vector.load %arg7[%c0_7, %c0_8] : memref<8x32xbf16, #tpu.memory_space<vmem>>, vector<8x32xbf16>
    %cst = arith.constant dense<0.000000e+00> : vector<8x8xf32>
    %19 = tpu.matmul %17, %13, %cst {dimension_numbers = #tpu.dot_dimension_numbers<[1], [1], [0], [0], [0, 0, 1, 0], [], []>} : vector<8x32xbf16>, vector<8x32xbf16>, vector<8x8xf32> -> vector<8x8xf32>
    %cst_9 = arith.constant dense<0.000000e+00> : vector<8x8xf32>
    %20 = tpu.matmul %17, %16, %cst_9 {dimension_numbers = #tpu.dot_dimension_numbers<[1], [1], [0], [0], [0, 0, 1, 0], [], []>} : vector<8x32xbf16>, vector<8x32xbf16>, vector<8x8xf32> -> vector<8x8xf32>
    %21 = arith.addf %19, %20 : vector<8x8xf32>
    %cst_10 = arith.constant dense<0.000000e+00> : vector<8x8xf32>
    %22 = tpu.matmul %18, %13, %cst_10 {dimension_numbers = #tpu.dot_dimension_numbers<[1], [1], [0], [0], [0, 0, 1, 0], [], []>} : vector<8x32xbf16>, vector<8x32xbf16>, vector<8x8xf32> -> vector<8x8xf32>
    %23 = arith.addf %21, %22 : vector<8x8xf32>
    %cst_11 = arith.constant dense<0xFF800000> : vector<8xf32>
    %24 = vector.multi_reduction <maximumf>, %23, %cst_11 [1] : vector<8x8xf32> to vector<8xf32>
    %25 = vector.shape_cast %24 : vector<8xf32> to vector<8x1xf32>
    %cst_12 = arith.constant dense<0xFF800000> : vector<1xf32>
    %26 = vector.multi_reduction <maximumf>, %25, %cst_12 [0] : vector<8x1xf32> to vector<1xf32>
    %27 = vector.shape_cast %26 : vector<1xf32> to vector<1x1xf32>
    %28 = vector.broadcast %27 : vector<1x1xf32> to vector<8x8xf32>
    %29 = arith.subf %23, %28 : vector<8x8xf32>
    %30 = math.exp %29 : vector<8x8xf32>
    %cst_13 = arith.constant dense<0.000000e+00> : vector<8xf32>
    %31 = vector.multi_reduction <add>, %30, %cst_13 [1] : vector<8x8xf32> to vector<8xf32>
    %32 = vector.shape_cast %31 : vector<8xf32> to vector<8x1xf32>
    %cst_14 = arith.constant dense<0.000000e+00> : vector<8xf32>
    %33 = vector.multi_reduction <add>, %30, %cst_14 [0] : vector<8x8xf32> to vector<8xf32>
    %34 = vector.shape_cast %33 : vector<8xf32> to vector<1x8xf32>
    %c0_15 = arith.constant 0 : index
    %c0_16 = arith.constant 0 : index
    %35 = vector.load %arg8[%c0_15, %c0_16] : memref<1x1xf32, #tpu.memory_space<vmem>>, vector<1x1xf32>
    %36 = arith.maximumf %35, %27 : vector<1x1xf32>
    %c0_17 = arith.constant 0 : index
    %c0_18 = arith.constant 0 : index
    %37 = vector.load %arg9[%c0_17, %c0_18] : memref<8x1xf32, #tpu.memory_space<vmem>>, vector<8x1xf32>
    %38 = arith.subf %35, %36 : vector<1x1xf32>
    %39 = math.exp %38 : vector<1x1xf32>
    %40 = vector.broadcast %39 : vector<1x1xf32> to vector<8x1xf32>
    %41 = arith.mulf %37, %40 : vector<8x1xf32>
    %42 = arith.subf %27, %36 : vector<1x1xf32>
    %43 = math.exp %42 : vector<1x1xf32>
    %44 = vector.broadcast %43 : vector<1x1xf32> to vector<8x1xf32>
    %45 = arith.mulf %32, %44 : vector<8x1xf32>
    %46 = arith.addf %41, %45 : vector<8x1xf32>
    %c0_19 = arith.constant 0 : index
    %c0_20 = arith.constant 0 : index
    %47 = vector.load %arg9[%c0_19, %c0_20] : memref<8x1xf32, #tpu.memory_space<vmem>>, vector<8x1xf32>
    tpu.vector_store %arg9[%c0_19, %c0_20], %46 {strides = array<i32>} : memref<8x1xf32, #tpu.memory_space<vmem>>, vector<8x1xf32>,
    %c0_21 = arith.constant 0 : index
    %c0_22 = arith.constant 0 : index
    %48 = vector.load %arg8[%c0_21, %c0_22] : memref<1x1xf32, #tpu.memory_space<vmem>>, vector<1x1xf32>
    tpu.vector_store %arg8[%c0_21, %c0_22], %36 {strides = array<i32>} : memref<1x1xf32, #tpu.memory_space<vmem>>, vector<1x1xf32>,
    %49 = arith.index_cast %arg1 : i32 to index
    %c0_23 = arith.constant 0 : index
    %50 = vector.load %arg10[%49, %c0_23] : memref<1x8xf32, #tpu.memory_space<vmem>>, vector<1x8xf32>
    %51 = vector.broadcast %27 : vector<1x1xf32> to vector<1x8xf32>
    %52 = arith.maximumf %50, %51 : vector<1x8xf32>
    %53 = arith.index_cast %arg1 : i32 to index
    %c0_24 = arith.constant 0 : index
    %54 = vector.load %arg11[%53, %c0_24] : memref<1x8xf32, #tpu.memory_space<vmem>>, vector<1x8xf32>
    %55 = arith.subf %50, %52 : vector<1x8xf32>
    %56 = math.exp %55 : vector<1x8xf32>
    %57 = arith.mulf %54, %56 : vector<1x8xf32>
    %58 = vector.broadcast %27 : vector<1x1xf32> to vector<1x8xf32>
    %59 = arith.subf %58, %52 : vector<1x8xf32>
    %60 = math.exp %59 : vector<1x8xf32>
    %61 = arith.mulf %34, %60 : vector<1x8xf32>
    %62 = arith.addf %57, %61 : vector<1x8xf32>
    %63 = arith.index_cast %arg1 : i32 to index
    %c0_25 = arith.constant 0 : index
    %64 = vector.load %arg10[%63, %c0_25] : memref<1x8xf32, #tpu.memory_space<vmem>>, vector<1x8xf32>
    tpu.vector_store %arg10[%63, %c0_25], %52 {strides = array<i32>} : memref<1x8xf32, #tpu.memory_space<vmem>>, vector<1x8xf32>,
    %65 = arith.index_cast %arg1 : i32 to index
    %c0_26 = arith.constant 0 : index
    %66 = vector.load %arg11[%65, %c0_26] : memref<1x8xf32, #tpu.memory_space<vmem>>, vector<1x8xf32>
    tpu.vector_store %arg11[%65, %c0_26], %62 {strides = array<i32>} : memref<1x8xf32, #tpu.memory_space<vmem>>, vector<1x8xf32>,
    %67 = arith.cmpi eq, %arg0, %arg1 : i32
    %68 = arith.extui %67 : i1 to i32
    %c0_i32_27 = arith.constant 0 : i32
    %69 = arith.cmpi ne, %68, %c0_i32_27 : i32
    scf.if %69 {
      %c0_35 = arith.constant 0 : index
      %c0_36 = arith.constant 0 : index
      %81 = vector.load %arg3[%c0_35, %c0_36] : memref<8x32xf32, #tpu.memory_space<vmem>>, vector<8x32xf32>
      %82 = arith.mulf %81, %12 : vector<8x32xf32>
      %cst_37 = arith.constant dense<0.000000e+00> : vector<8xf32>
      %83 = vector.multi_reduction <add>, %82, %cst_37 [1] : vector<8x32xf32> to vector<8xf32>
      %84 = vector.shape_cast %83 : vector<8xf32> to vector<8x1xf32>
      %cst_38 = arith.constant dense<0.000000e+00> : vector<1xf32>
      %85 = vector.multi_reduction <add>, %84, %cst_38 [0] : vector<8x1xf32> to vector<1xf32>
      %86 = vector.shape_cast %85 : vector<1xf32> to vector<1x1xf32>
      %c0_39 = arith.constant 0 : index
      %c0_40 = arith.constant 0 : index
      %87 = vector.load %arg12[%c0_39, %c0_40] : memref<1x1xf32, #tpu.memory_space<vmem>>, vector<1x1xf32>
      %cst_41 = arith.constant 2.000000e+00 : f32
      %88 = arith.mulf %cst_41, %0 : f32
      %89 = vector.broadcast %88 : f32 to vector<1x1xf32>
      %90 = arith.mulf %89, %86 : vector<1x1xf32>
      %91 = arith.subf %87, %90 : vector<1x1xf32>
      %c0_42 = arith.constant 0 : index
      %c0_43 = arith.constant 0 : index
      %92 = vector.load %arg12[%c0_42, %c0_43] : memref<1x1xf32, #tpu.memory_space<vmem>>, vector<1x1xf32>
      tpu.vector_store %arg12[%c0_42, %c0_43], %91 {strides = array<i32>} : memref<1x1xf32, #tpu.memory_space<vmem>>, vector<1x1xf32>,
    } else {
    }
    %c0_i32_28 = arith.constant 0 : i32
    %70 = arith.cmpi eq, %arg1, %c0_i32_28 : i32
    %71 = arith.extui %70 : i1 to i32
    %c0_i32_29 = arith.constant 0 : i32
    %72 = arith.cmpi ne, %71, %c0_i32_29 : i32
    scf.if %72 {
      %c0_35 = arith.constant 0 : index
      %c0_36 = arith.constant 0 : index
      %81 = vector.load %arg12[%c0_35, %c0_36] : memref<1x1xf32, #tpu.memory_space<vmem>>, vector<1x1xf32>
      %c0_37 = arith.constant 0 : index
      %c0_38 = arith.constant 0 : index
      %82 = vector.load %arg9[%c0_37, %c0_38] : memref<8x1xf32, #tpu.memory_space<vmem>>, vector<8x1xf32>
      %83 = math.log %82 : vector<8x1xf32>
      %c0_39 = arith.constant 0 : index
      %c0_40 = arith.constant 0 : index
      %84 = vector.load %arg8[%c0_39, %c0_40] : memref<1x1xf32, #tpu.memory_space<vmem>>, vector<1x1xf32>
      %85 = vector.broadcast %84 : vector<1x1xf32> to vector<8x1xf32>
      %86 = arith.addf %83, %85 : vector<8x1xf32>
      %cst_41 = arith.constant dense<0.000000e+00> : vector<8xf32>
      %87 = vector.multi_reduction <add>, %86, %cst_41 [1] : vector<8x1xf32> to vector<8xf32>
      %88 = vector.shape_cast %87 : vector<8xf32> to vector<8x1xf32>
      %cst_42 = arith.constant dense<0.000000e+00> : vector<1xf32>
      %89 = vector.multi_reduction <add>, %88, %cst_42 [0] : vector<8x1xf32> to vector<1xf32>
      %90 = vector.shape_cast %89 : vector<1xf32> to vector<1x1xf32>
      %91 = arith.addf %81, %90 : vector<1x1xf32>
      %c0_43 = arith.constant 0 : index
      %c0_44 = arith.constant 0 : index
      %92 = vector.load %arg12[%c0_43, %c0_44] : memref<1x1xf32, #tpu.memory_space<vmem>>, vector<1x1xf32>
      tpu.vector_store %arg12[%c0_43, %c0_44], %91 {strides = array<i32>} : memref<1x1xf32, #tpu.memory_space<vmem>>, vector<1x1xf32>,
    } else {
    }
    %c0_i32_30 = arith.constant 0 : i32
    %73 = arith.cmpi eq, %arg0, %c0_i32_30 : i32
    %74 = arith.extui %73 : i1 to i32
    %c0_i32_31 = arith.constant 0 : i32
    %75 = arith.cmpi ne, %74, %c0_i32_31 : i32
    scf.if %75 {
      %c0_35 = arith.constant 0 : index
      %c0_36 = arith.constant 0 : index
      %81 = vector.load %arg12[%c0_35, %c0_36] : memref<1x1xf32, #tpu.memory_space<vmem>>, vector<1x1xf32>
      %82 = math.log %62 : vector<1x8xf32>
      %83 = arith.addf %82, %52 : vector<1x8xf32>
      %cst_37 = arith.constant dense<0.000000e+00> : vector<1xf32>
      %84 = vector.multi_reduction <add>, %83, %cst_37 [1] : vector<1x8xf32> to vector<1xf32>
      %85 = vector.shape_cast %84 : vector<1xf32> to vector<1x1xf32>
      %cst_38 = arith.constant dense<0.000000e+00> : vector<1xf32>
      %86 = vector.multi_reduction <add>, %85, %cst_38 [0] : vector<1x1xf32> to vector<1xf32>
      %87 = vector.shape_cast %86 : vector<1xf32> to vector<1x1xf32>
      %88 = arith.addf %81, %87 : vector<1x1xf32>
      %c0_39 = arith.constant 0 : index
      %c0_40 = arith.constant 0 : index
      %89 = vector.load %arg12[%c0_39, %c0_40] : memref<1x1xf32, #tpu.memory_space<vmem>>, vector<1x1xf32>
      tpu.vector_store %arg12[%c0_39, %c0_40], %88 {strides = array<i32>} : memref<1x1xf32, #tpu.memory_space<vmem>>, vector<1x1xf32>,
    } else {
    }
    %c0_i32_32 = arith.constant 0 : i32
    %76 = arith.cmpi eq, %arg0, %c0_i32_32 : i32
    %c0_i32_33 = arith.constant 0 : i32
    %77 = arith.cmpi eq, %arg1, %c0_i32_33 : i32
    %78 = arith.andi %76, %77 : i1
    %79 = arith.extui %78 : i1 to i32
    %c0_i32_34 = arith.constant 0 : i32
    %80 = arith.cmpi ne, %79, %c0_i32_34 : i32
    scf.if %80 {
      %c0_35 = arith.constant 0 : index
      %c0_36 = arith.constant 0 : index
      %81 = vector.load %arg12[%c0_35, %c0_36] : memref<1x1xf32, #tpu.memory_space<vmem>>, vector<1x1xf32>
      %cst_37 = arith.constant 6.250000e-02 : f32
      %82 = vector.broadcast %cst_37 : f32 to vector<1x1xf32>
      %83 = arith.mulf %81, %82 : vector<1x1xf32>
      %c0_38 = arith.constant 0 : index
      %c0_39 = arith.constant 0 : index
      %84 = vector.load %arg5[%c0_38, %c0_39] : memref<1x1xf32, #tpu.memory_space<vmem>>, vector<1x1xf32>
      tpu.vector_store %arg5[%c0_38, %c0_39], %83 {strides = array<i32>} : memref<1x1xf32, #tpu.memory_space<vmem>>, vector<1x1xf32>,
    } else {
    }
    return
  }
  func.func @transform_0(%arg0: i32, %arg1: i32, %arg2: memref<1xf32, #tpu.memory_space<smem>>) -> (i32, i32) {
    %c0_i32 = arith.constant 0 : i32
    %c0_i32_0 = arith.constant 0 : i32
    return %arg0, %c0_i32 : i32, i32
  }
  func.func @transform_1(%arg0: i32, %arg1: i32, %arg2: memref<1xf32, #tpu.memory_space<smem>>) -> (i32, i32) {
    %c0_i32 = arith.constant 0 : i32
    %c0_i32_0 = arith.constant 0 : i32
    %c0_i32_1 = arith.constant 0 : i32
    return %c0_i32, %c0_i32_0 : i32, i32
  }
  func.func @transform_2(%arg0: i32, %arg1: i32, %arg2: memref<1xf32, #tpu.memory_space<smem>>) -> (i32, i32) {
    %c0_i32 = arith.constant 0 : i32
    %c0_i32_0 = arith.constant 0 : i32
    %c0_i32_1 = arith.constant 0 : i32
    return %c0_i32, %c0_i32_0 : i32, i32
  }
}

</mosaic_0001>

<llo_original>
// kernel: tpu_custom_call.1
$region0: #{tpu_custom_call.1}
  #allocation0 [shape = 'u32[]', space=smem, size = 0x4, offset = 0x4, fixed_abs, tag = 'smem constant byte address 0x4 - core index']
  #allocation1 [shape = 'u32[144,128]{1,0:T(1,128)}', space=vmem, size = 0x12000, scoped, tag = 'internal scratch']
  #allocation2 [shape = 'bf16[8,32]{1,0:T(8,128)(2,1)}', space=vmem, size = 0x800, scoped, tag = 'scratch operand']
  #allocation3 [shape = 'bf16[8,32]{1,0:T(8,128)(2,1)}', space=vmem, size = 0x800, scoped, tag = 'scratch operand']
  #allocation4 [shape = 'f32[1,1]{1,0:T(1,128)}', space=vmem, size = 0x200, scoped, tag = 'scratch operand']
  #allocation5 [shape = 'f32[8,1]{1,0:T(8,128)}', space=vmem, size = 0x1000, scoped, tag = 'scratch operand']
  #allocation6 [shape = 'f32[1,8]{1,0:T(1,128)}', space=vmem, size = 0x200, scoped, tag = 'scratch operand']
  #allocation7 [shape = 'f32[1,8]{1,0:T(1,128)}', space=vmem, size = 0x200, scoped, tag = 'scratch operand']
  #allocation8 [shape = 'f32[1,1]{1,0:T(1,128)}', space=vmem, size = 0x200, scoped, tag = 'scratch operand']
  #allocation9 [shape = 's32[1]{0}', space=sflag, size = 0x4, scoped, tag = 'scoped memory for tpu_custom_call.1']
  #allocation10 [shape = 'f32[1]{0:T(128)S(6)}', space=smem, size = 0x200, scoped, tag = 'prefetched SMEM operand 0']
  %s0 = inlined_call_operand.<no memory space> [shape: f32[1], index: 0, kind: input, shape index: {}]
  %s1 = inlined_call_operand.hbm [shape: f32[8,32], index: 1, kind: input, shape index: {}]
  %s2 = inlined_call_operand.hbm [shape: f32[8,32], index: 2, kind: input, shape index: {}]
  %s3 = inlined_call_operand.hbm [shape: f32[1,1], index: 3, kind: output, shape index: {}]
  %s4 = sld [smem:[#allocation0]]
  $region50: #{tpu_custom_call.1} parent=0
    _
  %s6 = ssub.s32 1, %s4
  %s7 = scalar_select 0, %s6, %s4
  %8 = sst [smem:[#allocation10]] %s0
  $region1: #{tpu_custom_call.1} parent=0
    #allocation11 [shape = 'u8[4096]{0}', space=vmem, size = 0x1000, scoped, tag = 'input window, operand 1, single buffered']
    #allocation12 [shape = 's32[1]{0}', space=sflag, size = 0x4, scoped, tag = 'scoped memory for tpu_custom_call.1']
    #allocation13 [shape = 's32[1]{0}', space=sflag, size = 0x4, scoped, tag = 'scoped memory for tpu_custom_call.1']
    #allocation14 [shape = 'u8[4096]{0}', space=vmem, size = 0x1000, scoped, tag = 'input window, operand 2, single buffered']
    #allocation15 [shape = 's32[1]{0}', space=sflag, size = 0x4, scoped, tag = 'scoped memory for tpu_custom_call.1']
    #allocation16 [shape = 'u8[512]{0}', space=vmem, size = 0x400, scoped, tag = 'output window, operand 0, single buffered']
    %9 = vsyncpa [#allocation12], 0
    %10 = vsyncpa [#allocation15], 0
    %11 = vsyncpa [#allocation13], 0
    // Predicated region
    $region2: #{tpu_custom_call.1} parent=1 // pred_check
      _
    $region3: #{tpu_custom_call.1} parent=1 // pred_check_branch
      %13 = sbr.rel (0) target = $region5
    $region4: #{tpu_custom_call.1} parent=1 // pred_region
      %s15 = ssub.s32 128, 128
      %16 = vsyncadd [#allocation12], %s15
      %s18 = sshll.u32 [#allocation11], 4
      %s19 = int_to_ptr.vmem [resolvable:$true] %s18
      %21 = dma.hbm_to_vmem [thread:$0]  %s1, 128, %s19, [#allocation12]
    $region5: #{tpu_custom_call.1} parent=1 // pred_fallthru
      _
    // Predicated region
    $region6: #{tpu_custom_call.1} parent=1 // pred_check
      _
    $region7: #{tpu_custom_call.1} parent=1 // pred_check_branch
      %23 = sbr.rel (0) target = $region9
    $region8: #{tpu_custom_call.1} parent=1 // pred_region
      %s25 = ssub.s32 128, 128
      %26 = vsyncadd [#allocation15], %s25
      %s28 = sshll.u32 [#allocation14], 4
      %s29 = int_to_ptr.vmem [resolvable:$true] %s28
      %31 = dma.hbm_to_vmem [thread:$0]  %s2, 128, %s29, [#allocation15]
    $region9: #{tpu_custom_call.1} parent=1 // pred_fallthru
      _
    // Predicated region
    $region10: #{tpu_custom_call.1} parent=1 // pred_check
      _
    $region11: #{tpu_custom_call.1} parent=1 // pred_check_branch
      %33 = sbr.rel (0) target = $region13
    $region12: #{tpu_custom_call.1} parent=1 // pred_region
      %34 = dma.done [#allocation12], 128
    $region13: #{tpu_custom_call.1} parent=1 // pred_fallthru
      _
    // Predicated region
    $region14: #{tpu_custom_call.1} parent=1 // pred_check
      _
    $region15: #{tpu_custom_call.1} parent=1 // pred_check_branch
      %36 = sbr.rel (0) target = $region17
    $region16: #{tpu_custom_call.1} parent=1 // pred_region
      %37 = dma.done [#allocation15], 128
    $region17: #{tpu_custom_call.1} parent=1 // pred_fallthru
      _
    %s39 = sld [smem:[#allocation10]]
    %p40 = scmp.eq.s32.totalorder 0, 0
    %p41 = scmp.eq.s32.totalorder 0, 0
    %p42 = pnand %p40, %p41
    %p43 = pneg %p42
    // Predicated region
    $region18: #{tpu_custom_call.1} parent=1 // pred_check
      _
    $region19: #{tpu_custom_call.1} parent=1 // pred_check_branch
      %45 = sbr.rel (%p42) target = $region21
    $region20: #{tpu_custom_call.1} parent=1 // pred_region
      %vm46 = vcmask 0
      %47 = vst.msk [vmem:[#allocation8] sm:$0x1] %vm46, 0.0
      %vm48 = vcmask 57344
      %49 = vst.msk [vmem:[#allocation6] sm:$0x1] %vm48, -inf
      %50 = vst.msk [vmem:[#allocation7] sm:$0x1] %vm48, 0.0
    $region21: #{tpu_custom_call.1} parent=1 // pred_fallthru
      _
    // Predicated region
    $region22: #{tpu_custom_call.1} parent=1 // pred_check
      %p51 = pneg %p41
    $region23: #{tpu_custom_call.1} parent=1 // pred_check_branch
      %53 = sbr.rel (%p51) target = $region25
    $region24: #{tpu_custom_call.1} parent=1 // pred_region
      %v54 = vld [vmem:[#allocation11] sm:$0xff]
      %v55 = vstv %s39
      %v56 = vmul.f32 %v54, %v55
      %v57 = vpack.c.bf16 %v56, %v56
      %vm58 = vcmask 257024
      %59 = vst.msk [vmem:[#allocation2] sm:$0xf] %vm58, %v57
      %v60 = vunpack.c.l.bf16 %v57
      %v61 = vsub.f32 %v56, %v60
      %v62 = vpack.c.bf16 %v61, %v61
      %63 = vst.msk [vmem:[#allocation3] sm:$0xf] %vm58, %v62
      %vm64 = vcmask 0
      %65 = vst.msk [vmem:[#allocation4] sm:$0x1] %vm64, -inf
      %vm66 = vcmask 7168
      %67 = vst.msk [vmem:[#allocation5] sm:$0xff] %vm66, 0.0
    $region25: #{tpu_custom_call.1} parent=1 // pred_fallthru
      _
    %s68 = smul.u32 0, 8
    %s69 = scalar_lea.vmem [#allocation14], %s68
    %v70 = vld [vmem:[%s69] sm:$0xff]
    %v71 = vpack.c.bf16 %v70, %v70
    %v72 = vunpack.c.l.bf16 %v71
    %v73 = vsub.f32 %v70, %v72
    %v74 = vpack.c.bf16 %v73, %v73
    %v75 = vld [vmem:[#allocation2] sm:$0xf]
    %v76 = vld [vmem:[#allocation3] sm:$0xf]
    %vm77 = vcmask 261120
    %v79 = vsel %vm77, %v75, 0
    %v82 = vsel %vm77, %v74, 0
    %84 = vmatprep.subr.bf16.mxu0 0
    %85 = vmatpush1.bf16.xpose.msra.mxu0 %v82
    %86 = vmatprep.subr.bf16.mxu0 0
    %87 = vmatpush1.bf16.xpose.msra.mxu0 0
    %88 = vmatprep.subr.bf16.mxu0 0
    %89 = vmatpush1.bf16.xpose.msra.mxu0 0
    %90 = vmatprep.subr.bf16.mxu0 0
    %91 = vmatpush1.bf16.xpose.msra.mxu0 0
    %92 = vmatprep.subr.bf16.mxu0 0
    %93 = vmatpush1.bf16.xpose.msra.mxu0 0
    %94 = vmatprep.subr.bf16.mxu0 0
    %95 = vmatpush1.bf16.xpose.msra.mxu0 0
    %96 = vmatprep.subr.bf16.mxu0 0
    %97 = vmatpush1.bf16.xpose.msra.mxu0 0
    %98 = vmatprep.subr.bf16.mxu0 0
    %99 = vmatpush1.bf16.xpose.msra.mxu0 0
    %100 = vmatprep.subr.bf16.mxu0 0
    %101 = vmatpush1.bf16.xpose.msra.mxu0 0
    %102 = vmatprep.subr.bf16.mxu0 0
    %103 = vmatpush1.bf16.xpose.msra.mxu0 0
    %104 = vmatprep.subr.bf16.mxu0 0
    %105 = vmatpush1.bf16.xpose.msra.mxu0 0
    %106 = vmatprep.subr.bf16.mxu0 0
    %107 = vmatpush1.bf16.xpose.msra.mxu0 0
    %108 = vmatprep.subr.bf16.mxu0 0
    %109 = vmatpush1.bf16.xpose.msra.mxu0 0
    %110 = vmatprep.subr.bf16.mxu0 0
    %111 = vmatpush1.bf16.xpose.msra.mxu0 0
    %112 = vmatprep.subr.bf16.mxu0 0
    %113 = vmatpush1.bf16.xpose.msra.mxu0 0
    %114 = vmatprep.subr.bf16.mxu0 0
    %115 = vmatpush1.bf16.xpose.msra.mxu0 0
    %116 = vmatprep.mubr.bf16.mxu0 0
    %117 = vmatmul.mubr.bf16.gmra.mrb[0].mxu0 %v79
    %v118 = vpop.f32.mrb[0].mxu0
    %v119 = vadd.f32 0.0, %v118
    %v120 = vpop.f32.mrb[0].mxu0
    %v121 = vpop.f32.mrb[0].mxu0
    %v122 = vpop.f32.mrb[0].mxu0
    %123 = vdwg.mxu0
    %v125 = vsel %vm77, %v71, 0
    %127 = vmatprep.subr.bf16.mxu0 0
    %128 = vmatpush1.bf16.xpose.msra.mxu0 %v125
    %129 = vmatprep.subr.bf16.mxu0 0
    %130 = vmatpush1.bf16.xpose.msra.mxu0 0
    %131 = vmatprep.subr.bf16.mxu0 0
    %132 = vmatpush1.bf16.xpose.msra.mxu0 0
    %133 = vmatprep.subr.bf16.mxu0 0
    %134 = vmatpush1.bf16.xpose.msra.mxu0 0
    %135 = vmatprep.subr.bf16.mxu0 0
    %136 = vmatpush1.bf16.xpose.msra.mxu0 0
    %137 = vmatprep.subr.bf16.mxu0 0
    %138 = vmatpush1.bf16.xpose.msra.mxu0 0
    %139 = vmatprep.subr.bf16.mxu0 0
    %140 = vmatpush1.bf16.xpose.msra.mxu0 0
    %141 = vmatprep.subr.bf16.mxu0 0
    %142 = vmatpush1.bf16.xpose.msra.mxu0 0
    %143 = vmatprep.subr.bf16.mxu0 0
    %144 = vmatpush1.bf16.xpose.msra.mxu0 0
    %145 = vmatprep.subr.bf16.mxu0 0
    %146 = vmatpush1.bf16.xpose.msra.mxu0 0
    %147 = vmatprep.subr.bf16.mxu0 0
    %148 = vmatpush1.bf16.xpose.msra.mxu0 0
    %149 = vmatprep.subr.bf16.mxu0 0
    %150 = vmatpush1.bf16.xpose.msra.mxu0 0
    %151 = vmatprep.subr.bf16.mxu0 0
    %152 = vmatpush1.bf16.xpose.msra.mxu0 0
    %153 = vmatprep.subr.bf16.mxu0 0
    %154 = vmatpush1.bf16.xpose.msra.mxu0 0
    %155 = vmatprep.subr.bf16.mxu0 0
    %156 = vmatpush1.bf16.xpose.msra.mxu0 0
    %157 = vmatprep.subr.bf16.mxu0 0
    %158 = vmatpush1.bf16.xpose.msra.mxu0 0
    %159 = vmatprep.mubr.bf16.mxu0 0
    %160 = vmatmul.mubr.bf16.gmra.mrb[0].mxu0 %v79
    %v161 = vpop.f32.mrb[0].mxu0
    %v162 = vadd.f32 %v119, %v161
    %v163 = vpop.f32.mrb[0].mxu0
    %v164 = vpop.f32.mrb[0].mxu0
    %v165 = vpop.f32.mrb[0].mxu0
    %166 = vdwg.mxu0
    %v168 = vsel %vm77, %v76, 0
    %170 = vmatprep.subr.bf16.mxu0 0
    %171 = vmatpush1.bf16.xpose.msra.mxu0 %v125
    %172 = vmatprep.subr.bf16.mxu0 0
    %173 = vmatpush1.bf16.xpose.msra.mxu0 0
    %174 = vmatprep.subr.bf16.mxu0 0
    %175 = vmatpush1.bf16.xpose.msra.mxu0 0
    %176 = vmatprep.subr.bf16.mxu0 0
    %177 = vmatpush1.bf16.xpose.msra.mxu0 0
    %178 = vmatprep.subr.bf16.mxu0 0
    %179 = vmatpush1.bf16.xpose.msra.mxu0 0
    %180 = vmatprep.subr.bf16.mxu0 0
    %181 = vmatpush1.bf16.xpose.msra.mxu0 0
    %182 = vmatprep.subr.bf16.mxu0 0
    %183 = vmatpush1.bf16.xpose.msra.mxu0 0
    %184 = vmatprep.subr.bf16.mxu0 0
    %185 = vmatpush1.bf16.xpose.msra.mxu0 0
    %186 = vmatprep.subr.bf16.mxu0 0
    %187 = vmatpush1.bf16.xpose.msra.mxu0 0
    %188 = vmatprep.subr.bf16.mxu0 0
    %189 = vmatpush1.bf16.xpose.msra.mxu0 0
    %190 = vmatprep.subr.bf16.mxu0 0
    %191 = vmatpush1.bf16.xpose.msra.mxu0 0
    %192 = vmatprep.subr.bf16.mxu0 0
    %193 = vmatpush1.bf16.xpose.msra.mxu0 0
    %194 = vmatprep.subr.bf16.mxu0 0
    %195 = vmatpush1.bf16.xpose.msra.mxu0 0
    %196 = vmatprep.subr.bf16.mxu0 0
    %197 = vmatpush1.bf16.xpose.msra.mxu0 0
    %198 = vmatprep.subr.bf16.mxu0 0
    %199 = vmatpush1.bf16.xpose.msra.mxu0 0
    %200 = vmatprep.subr.bf16.mxu0 0
    %201 = vmatpush1.bf16.xpose.msra.mxu0 0
    %202 = vmatprep.mubr.bf16.mxu0 0
    %203 = vmatmul.mubr.bf16.gmra.mrb[0].mxu0 %v168
    %v204 = vpop.f32.mrb[0].mxu0
    %v205 = vadd.f32 0.0, %v204
    %v206 = vpop.f32.mrb[0].mxu0
    %v207 = vpop.f32.mrb[0].mxu0
    %v208 = vpop.f32.mrb[0].mxu0
    %209 = vdwg.mxu0
    %v210 = vadd.f32 %v162, %v205
    %vm211 = vcmask 64512
    %v212 = vsel %vm211, %v210, -inf
    %213 = vmax.xlane.f32.xlu0 %v212
    %v214 = vpop.xlane.xlu0 %213
    %v215 = vrot.slane %v214, 4
    %v216 = vmax.f32 %v214, %v215
    %v217 = vrot.slane %v216, 2
    %v218 = vmax.f32 %v216, %v217
    %v219 = vrot.slane %v218, 1
    %v220 = vmax.f32 %v218, %v219
    %v221 = vsub.f32 %v210, %v220
    %v222 = vmul.f32 %v221, 1.442695
    %v223 = vpow.pop %v222
    %v224 = vsel %vm211, %v223, 0.0
    %225 = vadd.xlane.f32.xlu0 %v224
    %v226 = vpop.xlane.xlu0 %225
    %v227 = vrot.slane %v224, 4
    %v228 = vadd.f32 %v224, %v227
    %v229 = vrot.slane %v228, 2
    %v230 = vadd.f32 %v228, %v229
    %v231 = vrot.slane %v230, 1
    %v232 = vadd.f32 %v230, %v231
    %v233 = vld [vmem:[#allocation4] sm:$0x1]
    %v234 = vmax.f32 %v233, %v220
    %v235 = vld [vmem:[#allocation5] sm:$0xff]
    %v236 = vsub.f32 %v233, %v234
    %v237 = vmul.f32 %v236, 1.442695
    %v238 = vpow.pop %v237
    %v240 = vlaneseq
    %v241 = vshrl.u32 %v240, 7
    %v242 = vsub.s32 0, %v241
    %v243 = vrot.slane %v238, %v242
    %v245 = vmul.f32 %v235, %v243
    %v246 = vsub.f32 %v220, %v234
    %v247 = vmul.f32 %v246, 1.442695
    %v248 = vpow.pop %v247
    %v250 = vlaneseq
    %v251 = vshrl.u32 %v250, 7
    %v252 = vsub.s32 0, %v251
    %v253 = vrot.slane %v248, %v252
    %v255 = vmul.f32 %v226, %v253
    %v256 = vadd.f32 %v245, %v255
    %vm257 = vcmask 7168
    %258 = vst.msk [vmem:[#allocation5] sm:$0xff] %vm257, %v256
    %vm259 = vcmask 0
    %260 = vst.msk [vmem:[#allocation4] sm:$0x1] %vm259, %v234
    %v261 = vld [vmem:[#allocation6] sm:$0x1]
    %v262 = vmax.f32 %v261, %v220
    %v263 = vld [vmem:[#allocation7] sm:$0x1]
    %v264 = vsub.f32 %v261, %v262
    %v265 = vmul.f32 %v264, 1.442695
    %v266 = vpow.pop %v265
    %v267 = vmul.f32 %v263, %v266
    %v268 = vsub.f32 %v220, %v262
    %v269 = vmul.f32 %v268, 1.442695
    %v270 = vpow.pop %v269
    %v271 = vmul.f32 %v232, %v270
    %v272 = vadd.f32 %v267, %v271
    %vm273 = vcmask 57344
    %274 = vst.msk [vmem:[#allocation6] sm:$0x1] %vm273, %v262
    %275 = vst.msk [vmem:[#allocation7] sm:$0x1] %vm273, %v272
    %p276 = scmp.eq.s32.totalorder 0, 0
    // Predicated region
    $region26: #{tpu_custom_call.1} parent=1 // pred_check
      %p277 = pneg %p276
    $region27: #{tpu_custom_call.1} parent=1 // pred_check_branch
      %279 = sbr.rel (%p277) target = $region29
    $region28: #{tpu_custom_call.1} parent=1 // pred_region
      %v280 = vld [vmem:[#allocation11] sm:$0xff]
      %v281 = vmul.f32 %v280, %v70
      %v282 = vsel %vm77, %v281, 0.0
      %283 = vadd.xlane.f32.xlu0 %v282
      %v284 = vpop.xlane.xlu0 %283
      %v285 = vrot.slane %v284, 4
      %v286 = vadd.f32 %v284, %v285
      %v287 = vrot.slane %v286, 2
      %v288 = vadd.f32 %v286, %v287
      %v289 = vrot.slane %v288, 1
      %v290 = vadd.f32 %v288, %v289
      %v291 = vld [vmem:[#allocation8] sm:$0x1]
      %s292 = smul.f32 %s39, 2.0
      %v293 = vstv %s292
      %v294 = vmul.f32 %v293, %v290
      %v295 = vsub.f32 %v291, %v294
      %296 = vst.msk [vmem:[#allocation8] sm:$0x1] %vm259, %v295
    $region29: #{tpu_custom_call.1} parent=1 // pred_fallthru
      _
    // Predicated region
    $region30: #{tpu_custom_call.1} parent=1 // pred_check
      %p297 = pneg %p41
    $region31: #{tpu_custom_call.1} parent=1 // pred_check_branch
      %299 = sbr.rel (%p297) target = $region33
    $region32: #{tpu_custom_call.1} parent=1 // pred_region
      %v300 = vld [vmem:[#allocation8] sm:$0x1]
      %v301 = vld [vmem:[#allocation5] sm:$0xff]
      %v302 = vlog2.pop %v301
      %v303 = vmul.f32 %v302, 0.6931472
      %v304 = vld [vmem:[#allocation4] sm:$0x1]
      %v306 = vlaneseq
      %v307 = vshrl.u32 %v306, 7
      %v308 = vsub.s32 0, %v307
      %v309 = vrot.slane %v304, %v308
      %v311 = vadd.f32 %v303, %v309
      %v312 = vadd.f32 %v311, 0.0
      %v313 = vsel %vm257, %v312, 0.0
      %v314 = vrot.slane %v313, 4
      %v315 = vadd.f32 %v313, %v314
      %v316 = vrot.slane %v315, 2
      %v317 = vadd.f32 %v315, %v316
      %v318 = vrot.slane %v317, 1
      %v319 = vadd.f32 %v317, %v318
      %v320 = vadd.f32 %v300, %v319
      %321 = vst.msk [vmem:[#allocation8] sm:$0x1] %vm259, %v320
    $region33: #{tpu_custom_call.1} parent=1 // pred_fallthru
      _
    // Predicated region
    $region34: #{tpu_custom_call.1} parent=1 // pred_check
      %p322 = pneg %p40
    $region35: #{tpu_custom_call.1} parent=1 // pred_check_branch
      %324 = sbr.rel (%p322) target = $region37
    $region36: #{tpu_custom_call.1} parent=1 // pred_region
      %v325 = vld [vmem:[#allocation8] sm:$0x1]
      %v326 = vlog2.pop %v272
      %v327 = vmul.f32 %v326, 0.6931472
      %v328 = vadd.f32 %v327, %v262
      %v329 = vsel %vm273, %v328, 0.0
      %330 = vadd.xlane.f32.xlu0 %v329
      %v331 = vpop.xlane.xlu0 %330
      %v332 = vadd.f32 %v331, 0.0
      %v333 = vadd.f32 %v325, %v332
      %334 = vst.msk [vmem:[#allocation8] sm:$0x1] %vm259, %v333
    $region37: #{tpu_custom_call.1} parent=1 // pred_fallthru
      _
    // Predicated region
    $region38: #{tpu_custom_call.1} parent=1 // pred_check
      _
    $region39: #{tpu_custom_call.1} parent=1 // pred_check_branch
      %336 = sbr.rel (%p42) target = $region41
    $region40: #{tpu_custom_call.1} parent=1 // pred_region
      %v337 = vld [vmem:[#allocation8] sm:$0x1]
      %v338 = vmul.f32 %v337, 0.0625
      %339 = vst.msk [vmem:[#allocation16] sm:$0x1] %vm259, %v338
    $region41: #{tpu_custom_call.1} parent=1 // pred_fallthru
      _
    // Predicated region
    $region42: #{tpu_custom_call.1} parent=1 // pred_check
      _
    $region43: #{tpu_custom_call.1} parent=1 // pred_check_branch
      %341 = sbr.rel (0) target = $region45
    $region44: #{tpu_custom_call.1} parent=1 // pred_region
      %s343 = ssub.s32 16, 16
      %344 = vsyncadd [#allocation13], %s343
      %s346 = sshll.u32 [#allocation16], 4
      %s347 = int_to_ptr.vmem [resolvable:$true] %s346
      %349 = dma.vmem_to_hbm [thread:$0]  %s347, 16, %s3, [#allocation13]
    $region45: #{tpu_custom_call.1} parent=1 // pred_fallthru
      _
    // Predicated region
    $region46: #{tpu_custom_call.1} parent=1 // pred_check
      _
    $region47: #{tpu_custom_call.1} parent=1 // pred_check_branch
      %351 = sbr.rel (0) target = $region49
    $region48: #{tpu_custom_call.1} parent=1 // pred_region
      %352 = dma.done [#allocation13], 16
    $region49: #{tpu_custom_call.1} parent=1 // pred_fallthru
      _
    %353 = vsyncpa [#allocation12], 1
    %354 = vsyncpa [#allocation15], 1
    %355 = vsyncpa [#allocation13], 1

</llo_original>
